<compile_context>
chip_gen: v5e
topology: v5e:2x2
jax: 0.10.0
libtpu: 0.0.40
codegen_flags: <defaults>
</compile_context>

<pallas_src>
import jax
import jax.numpy as jnp
from jax.experimental import pallas as pl
from jax.experimental.pallas import tpu as pltpu


def qfunction_kernel(x_ref, w1_ref, b1_ref, w2_ref, b2_ref,
                     w3_row_ref, b3_ref, out_ref):
    # x_ref:  [tb, d_in] bf16          (d_in = obs_dim + act_dim, concat done in wrapper)
    # w1_ref: [d_in, 256] bf16         b1_ref: [1, 256] f32
    # w2_ref: [256, 256] bf16          b2_ref: [1, 256] f32
    # w3_row_ref: [1, 256] f32         b3_ref: [1, 1] f32
    # out_ref: [tb, 1] f32

    # Layer 1: single K=d_in MXU pass, f32 accumulation.
    h1 = jnp.dot(x_ref[...], w1_ref[...], preferred_element_type=jnp.float32)
    h1 = jnp.maximum(h1 + b1_ref[...], 0.0)              # f32 bias + ReLU (v5e-safe)

    # Layer 2: bf16 MXU, f32 accumulation.
    h2 = jnp.dot(h1.astype(jnp.bfloat16), w2_ref[...],
                 preferred_element_type=jnp.float32)
    h2 = jnp.maximum(h2 + b2_ref[...], 0.0)               # f32 bias + ReLU

    # Layer 3 (256 -> 1): VPU multiply + XLU lane reduction instead of an
    # N=1 matmul (keeps the MXU slot free, avoids the MRF/MRB drain).
    q = jnp.sum(h2 * w3_row_ref[...], axis=-1, keepdims=True) + b3_ref[...]
    out_ref[...] = q.astype(out_ref.dtype)


def prepare_params(params):
    """One-time (off hot path) conversion of torch-style params to kernel layout."""
    w1, b1, w2, b2, w3, b3 = params
    return (w1.astype(jnp.bfloat16),                   # [d_in, 256]
            b1.reshape(1, -1).astype(jnp.float32),     # [1, 256]
            w2.astype(jnp.bfloat16),                   # [256, 256]
            b2.reshape(1, -1).astype(jnp.float32),     # [1, 256]
            w3.reshape(1, -1).astype(jnp.float32),     # [1, 256]
            b3.reshape(1, 1).astype(jnp.float32))      # [1, 1]


def _round_up(x, m):
    return ((x + m - 1) // m) * m


def _num_tensorcores_per_chip():
    """Best-effort detection: v7x has 2 TensorCores per chip, v5e/v6e have 1."""
    try:
        kind = (getattr(jax.devices()[0], "device_kind", "") or "").lower()
    except Exception:
        return 1
    return 2 if "v7" in kind else 1


def qfunction_forward(obs, act, kparams, *, tb=1024):
    """Pallas-backed QFunction forward. Returns shape [B] (squeezed)."""
    w1, b1, w2, b2, w3_row, b3 = kparams
    B, obs_dim = obs.shape
    act_dim = act.shape[1]
    d_in = obs_dim + act_dim
    H = w2.shape[0]

    # Tiny wrapper-side concat (~2*d_in bytes/row of HBM traffic) so layer 1
    # is a single K=d_in matmul in the kernel; cast to bf16 at the boundary.
    x = jnp.concatenate([obs, act], axis=-1).astype(jnp.bfloat16)

    # Batch tile: shrink (to a sublane multiple) when the whole batch fits in
    # one block; on v7x cap so the grid has >=2 steps for moderate batches.
    tb = min(tb, max(8, _round_up(B, 8)))
    if _num_tensorcores_per_chip() >= 2 and B > 256:
        tb = min(tb, max(256, _round_up(pl.cdiv(B, 2), 256)))
    grid = (pl.cdiv(B, tb),)

    def fixed_spec(shape):
        return pl.BlockSpec(shape, lambda i: (0, 0))   # VMEM-resident across grid

    q = pl.pallas_call(
        qfunction_kernel,
        out_shape=jax.ShapeDtypeStruct((B, 1), jnp.float32),
        grid=grid,
        in_specs=[
            pl.BlockSpec((tb, d_in), lambda i: (i, 0)),   # x (bf16), batch-tiled
            fixed_spec((d_in, H)),                        # w1
            fixed_spec((1, H)),                           # b1
            fixed_spec((H, H)),                           # w2
            fixed_spec((1, H)),                           # b2
            fixed_spec((1, H)),                           # w3 row
            fixed_spec((1, 1)),                           # b3
        ],
        out_specs=pl.BlockSpec((tb, 1), lambda i: (i, 0)),
        compiler_params=pltpu.CompilerParams(
            dimension_semantics=("parallel",),       # batch sharded across TCs on v7x
            vmem_limit_bytes=32 * 1024 * 1024,       # headroom on v7x 64 MiB VMEM,
        ),                                           # above v5e's 16 MiB default
    )(x, w1, b1, w2, b2, w3_row, b3)

    # torch.squeeze(q, -1)
    return jnp.squeeze(q, axis=-1)


def init_params(key, obs_dim, act_dim, hidden=256):
    """Deterministic init mimicking PyTorch Linear default (U[-1/sqrt(fan_in), ...])."""
    d_in = obs_dim + act_dim
    keys = jax.random.split(key, 6)

    def lin(kw, kb, fan_in, fan_out):
        bound = 1.0 / jnp.sqrt(jnp.float32(fan_in))
        w = jax.random.uniform(kw, (fan_in, fan_out), jnp.float32, -bound, bound)
        b = jax.random.uniform(kb, (1, fan_out), jnp.float32, -bound, bound)
        return w, b

    w1, b1 = lin(keys[0], keys[1], d_in, hidden)
    w2, b2 = lin(keys[2], keys[3], hidden, hidden)
    w3, b3 = lin(keys[4], keys[5], hidden, 1)
    return (w1, b1, w2, b2, w3, b3)


def reference_forward(obs, act, params):
    """Pure-JAX f32 reference for correctness checking."""
    w1, b1, w2, b2, w3, b3 = params
    x = jnp.concatenate([obs, act], axis=-1)
    h1 = jnp.maximum(x @ w1 + b1, 0.0)
    h2 = jnp.maximum(h1 @ w2 + b2, 0.0)
    q = h2 @ w3 + b3
    return jnp.squeeze(q, axis=-1)


if __name__ == "__main__":
    key = jax.random.PRNGKey(0)
    k_obs, k_act, k_par, k_obs2, k_act2 = jax.random.split(key, 5)

    obs_dim, act_dim = 14, 2   # small shapes consistent with the module
    params = init_params(k_par, obs_dim, act_dim)
    kparams = prepare_params(params)

    # 1) Small shipped-size batch (single grid step).
    batch = 8
    obs = jax.random.normal(k_obs, (batch, obs_dim), jnp.float32)
    act = jax.random.normal(k_act, (batch, act_dim), jnp.float32)
    q = jax.block_until_ready(qfunction_forward(obs, act, kparams))
    q_ref = reference_forward(obs, act, params)
    assert q.shape == (batch,), q.shape
    # bf16 inputs/matmuls with f32 accumulation: loosen tolerance vs. f32 reference.
    assert jnp.allclose(q, q_ref, atol=2e-2, rtol=2e-2), (q, q_ref)

    # 2) Multi-step grid with a ragged tail (exercises batch tiling + padding).
    batch2 = 300
    obs2 = jax.random.normal(k_obs2, (batch2, obs_dim), jnp.float32)
    act2 = jax.random.normal(k_act2, (batch2, act_dim), jnp.float32)
    q2 = jax.block_until_ready(qfunction_forward(obs2, act2, kparams, tb=128))
    q2_ref = reference_forward(obs2, act2, params)
    assert q2.shape == (batch2,), q2.shape
    assert jnp.allclose(q2, q2_ref, atol=2e-2, rtol=2e-2), (q2, q2_ref)

    print("KERNEL_OK")
</pallas_src>

<mosaic_0001>
module attributes {stable_mosaic.version = 11 : i64} {
  func.func @qfunction_kernel(%arg0: i32, %arg1: memref<8x16xbf16, #tpu.memory_space<vmem>>, %arg2: memref<16x256xbf16, #tpu.memory_space<vmem>>, %arg3: memref<1x256xf32, #tpu.memory_space<vmem>>, %arg4: memref<256x256xbf16, #tpu.memory_space<vmem>>, %arg5: memref<1x256xf32, #tpu.memory_space<vmem>>, %arg6: memref<1x256xf32, #tpu.memory_space<vmem>>, %arg7: memref<1x1xf32, #tpu.memory_space<vmem>>, %arg8: memref<8x1xf32, #tpu.memory_space<vmem>>) attributes {dimension_semantics = [#tpu.dimension_semantics<parallel>], iteration_bounds = array<i64: 1>, scalar_prefetch = 0 : i64, scratch_operands = 0 : i64, tpu.core_type = #tpu.core_type<tc>, window_params = [{transform_indices = @transform_0, window_bounds = array<i64: 8, 16>}, {pipeline_mode = #tpu.pipeline_mode<synchronous>, transform_indices = @transform_1, window_bounds = array<i64: 16, 256>}, {pipeline_mode = #tpu.pipeline_mode<synchronous>, transform_indices = @transform_2, window_bounds = array<i64: 1, 256>}, {pipeline_mode = #tpu.pipeline_mode<synchronous>, transform_indices = @transform_3, window_bounds = array<i64: 256, 256>}, {pipeline_mode = #tpu.pipeline_mode<synchronous>, transform_indices = @transform_4, window_bounds = array<i64: 1, 256>}, {pipeline_mode = #tpu.pipeline_mode<synchronous>, transform_indices = @transform_5, window_bounds = array<i64: 1, 256>}, {pipeline_mode = #tpu.pipeline_mode<synchronous>, transform_indices = @transform_6, window_bounds = array<i64: 1, 1>}, {transform_indices = @transform_7, window_bounds = array<i64: 8, 1>}]} {
    %c0 = arith.constant 0 : index
    %c0_0 = arith.constant 0 : index
    %0 = vector.load %arg1[%c0, %c0_0] : memref<8x16xbf16, #tpu.memory_space<vmem>>, vector<8x16xbf16>
    %c0_1 = arith.constant 0 : index
    %c0_2 = arith.constant 0 : index
    %1 = vector.load %arg2[%c0_1, %c0_2] : memref<16x256xbf16, #tpu.memory_space<vmem>>, vector<16x256xbf16>
    %cst = arith.constant dense<0.000000e+00> : vector<8x256xf32>
    %2 = tpu.matmul %0, %1, %cst {dimension_numbers = #tpu.dot_dimension_numbers<[1], [0], [0], [1], [0, 0, 1, 1], [], []>} : vector<8x16xbf16>, vector<16x256xbf16>, vector<8x256xf32> -> vector<8x256xf32>
    %c0_3 = arith.constant 0 : index
    %c0_4 = arith.constant 0 : index
    %3 = vector.load %arg3[%c0_3, %c0_4] : memref<1x256xf32, #tpu.memory_space<vmem>>, vector<1x256xf32>
    %4 = vector.broadcast %3 : vector<1x256xf32> to vector<8x256xf32>
    %5 = arith.addf %2, %4 : vector<8x256xf32>
    %cst_5 = arith.constant 0.000000e+00 : f32
    %6 = vector.broadcast %cst_5 : f32 to vector<8x256xf32>
    %7 = arith.maximumf %5, %6 : vector<8x256xf32>
    %8 = arith.truncf %7 : vector<8x256xf32> to vector<8x256xbf16>
    %c0_6 = arith.constant 0 : index
    %c0_7 = arith.constant 0 : index
    %9 = vector.load %arg4[%c0_6, %c0_7] : memref<256x256xbf16, #tpu.memory_space<vmem>>, vector<256x256xbf16>
    %cst_8 = arith.constant dense<0.000000e+00> : vector<8x256xf32>
    %10 = tpu.matmul %8, %9, %cst_8 {dimension_numbers = #tpu.dot_dimension_numbers<[1], [0], [0], [1], [0, 0, 1, 1], [], []>} : vector<8x256xbf16>, vector<256x256xbf16>, vector<8x256xf32> -> vector<8x256xf32>
    %c0_9 = arith.constant 0 : index
    %c0_10 = arith.constant 0 : index
    %11 = vector.load %arg5[%c0_9, %c0_10] : memref<1x256xf32, #tpu.memory_space<vmem>>, vector<1x256xf32>
    %12 = vector.broadcast %11 : vector<1x256xf32> to vector<8x256xf32>
    %13 = arith.addf %10, %12 : vector<8x256xf32>
    %cst_11 = arith.constant 0.000000e+00 : f32
    %14 = vector.broadcast %cst_11 : f32 to vector<8x256xf32>
    %15 = arith.maximumf %13, %14 : vector<8x256xf32>
    %c0_12 = arith.constant 0 : index
    %c0_13 = arith.constant 0 : index
    %16 = vector.load %arg6[%c0_12, %c0_13] : memref<1x256xf32, #tpu.memory_space<vmem>>, vector<1x256xf32>
    %17 = vector.broadcast %16 : vector<1x256xf32> to vector<8x256xf32>
    %18 = arith.mulf %15, %17 : vector<8x256xf32>
    %cst_14 = arith.constant dense<0.000000e+00> : vector<8xf32>
    %19 = vector.multi_reduction <add>, %18, %cst_14 [1] : vector<8x256xf32> to vector<8xf32>
    %20 = vector.shape_cast %19 : vector<8xf32> to vector<8x1xf32>
    %c0_15 = arith.constant 0 : index
    %c0_16 = arith.constant 0 : index
    %21 = vector.load %arg7[%c0_15, %c0_16] : memref<1x1xf32, #tpu.memory_space<vmem>>, vector<1x1xf32>
    %22 = vector.broadcast %21 : vector<1x1xf32> to vector<8x1xf32>
    %23 = arith.addf %20, %22 : vector<8x1xf32>
    %c0_17 = arith.constant 0 : index
    %c0_18 = arith.constant 0 : index
    %24 = vector.load %arg8[%c0_17, %c0_18] : memref<8x1xf32, #tpu.memory_space<vmem>>, vector<8x1xf32>
    tpu.vector_store %arg8[%c0_17, %c0_18], %23 {strides = array<i32>} : memref<8x1xf32, #tpu.memory_space<vmem>>, vector<8x1xf32>,
    return
  }
  func.func @transform_0(%arg0: i32) -> (i32, i32) {
    %c0_i32 = arith.constant 0 : i32
    %c0_i32_0 = arith.constant 0 : i32
    return %arg0, %c0_i32 : i32, i32
  }
  func.func @transform_1(%arg0: i32) -> (i32, i32) {
    %c0_i32 = arith.constant 0 : i32
    %c0_i32_0 = arith.constant 0 : i32
    %c0_i32_1 = arith.constant 0 : i32
    return %c0_i32, %c0_i32_0 : i32, i32
  }
  func.func @transform_2(%arg0: i32) -> (i32, i32) {
    %c0_i32 = arith.constant 0 : i32
    %c0_i32_0 = arith.constant 0 : i32
    %c0_i32_1 = arith.constant 0 : i32
    return %c0_i32, %c0_i32_0 : i32, i32
  }
  func.func @transform_3(%arg0: i32) -> (i32, i32) {
    %c0_i32 = arith.constant 0 : i32
    %c0_i32_0 = arith.constant 0 : i32
    %c0_i32_1 = arith.constant 0 : i32
    return %c0_i32, %c0_i32_0 : i32, i32
  }
  func.func @transform_4(%arg0: i32) -> (i32, i32) {
    %c0_i32 = arith.constant 0 : i32
    %c0_i32_0 = arith.constant 0 : i32
    %c0_i32_1 = arith.constant 0 : i32
    return %c0_i32, %c0_i32_0 : i32, i32
  }
  func.func @transform_5(%arg0: i32) -> (i32, i32) {
    %c0_i32 = arith.constant 0 : i32
    %c0_i32_0 = arith.constant 0 : i32
    %c0_i32_1 = arith.constant 0 : i32
    return %c0_i32, %c0_i32_0 : i32, i32
  }
  func.func @transform_6(%arg0: i32) -> (i32, i32) {
    %c0_i32 = arith.constant 0 : i32
    %c0_i32_0 = arith.constant 0 : i32
    %c0_i32_1 = arith.constant 0 : i32
    return %c0_i32, %c0_i32_0 : i32, i32
  }
  func.func @transform_7(%arg0: i32) -> (i32, i32) {
    %c0_i32 = arith.constant 0 : i32
    %c0_i32_0 = arith.constant 0 : i32
    return %arg0, %c0_i32 : i32, i32
  }
}

</mosaic_0001>

<llo_original>
// kernel: tpu_custom_call.1
$region0: #{tpu_custom_call.1}
  #allocation0 [shape = 'u32[]', space=smem, size = 0x4, offset = 0x4, fixed_abs, tag = 'smem constant byte address 0x4 - core index']
  #allocation1 [shape = 'u32[72,128]{1,0:T(1,128)}', space=vmem, size = 0x9000, scoped, tag = 'internal scratch']
  #allocation2 [shape = 'f32[1,1]{1,0:T(1,128)S(1)}', space=vmem, size = 0x200, scoped, tag = 'scoped memory for tpu_custom_call.1']
  %s0 = inlined_call_operand.hbm [shape: bf16[8,16], index: 0, kind: input, shape index: {}]
  %s1 = inlined_call_operand.hbm [shape: bf16[16,256], index: 1, kind: input, shape index: {}]
  %s2 = inlined_call_operand.vmem [shape: f32[1,256], index: 2, kind: input, shape index: {}]
  %s3 = inlined_call_operand.hbm [shape: bf16[256,256], index: 3, kind: input, shape index: {}]
  %s4 = inlined_call_operand.vmem [shape: f32[1,256], index: 4, kind: input, shape index: {}]
  %s5 = inlined_call_operand.vmem [shape: f32[1,256], index: 5, kind: input, shape index: {}]
  %s6 = inlined_call_operand.<no memory space> [shape: f32[1,1], index: 6, kind: input, shape index: {}]
  %s7 = inlined_call_operand.vmem [shape: f32[8,1], index: 7, kind: output, shape index: {}]
  %s8 = sld [smem:[#allocation0]]
  $region50: #{tpu_custom_call.1} parent=0
    _
  %s10 = ssub.s32 1, %s8
  %s11 = scalar_select 0, %s10, %s8
  %v12 = vstv %s6
  %13 = vst [vmem:[#allocation2] sm:$0x1] %v12
  $region1: #{tpu_custom_call.1} parent=0
    #allocation3 [shape = 'u8[2048]{0}', space=vmem, size = 0x800, scoped, tag = 'input window, operand 0, single buffered']
    #allocation4 [shape = 's32[1]{0}', space=sflag, size = 0x4, scoped, tag = 'scoped memory for tpu_custom_call.1']
    #allocation5 [shape = 'u8[8192]{0}', space=vmem, size = 0x2000, scoped, tag = 'input window, operand 1, single buffered']
    #allocation6 [shape = 's32[1]{0}', space=sflag, size = 0x4, scoped, tag = 'scoped memory for tpu_custom_call.1']
    #allocation7 [shape = 'u8[131072]{0}', space=vmem, size = 0x20000, scoped, tag = 'input window, operand 3, single buffered']
    %14 = vsyncpa [#allocation4], 0
    %15 = vsyncpa [#allocation6], 0
    // Predicated region
    $region2: #{tpu_custom_call.1} parent=1 // pred_check
      _
    $region3: #{tpu_custom_call.1} parent=1 // pred_check_branch
      %17 = sbr.rel (0) target = $region5
    $region4: #{tpu_custom_call.1} parent=1 // pred_region
      %19 = vsyncadd [#allocation4], 0
      %s21 = sshll.u32 %s0, 4
      %s22 = int_to_ptr.hbm [resolvable:$true] %s21
      %s23 = sshll.u32 [#allocation3], 4
      %s24 = int_to_ptr.vmem [resolvable:$true] %s23
      %26 = dma.hbm_to_vmem [thread:$0]  %s22, 64, %s24, [#allocation4]
    $region5: #{tpu_custom_call.1} parent=1 // pred_fallthru
      _
    // Predicated region
    $region6: #{tpu_custom_call.1} parent=1 // pred_check
      _
    $region7: #{tpu_custom_call.1} parent=1 // pred_check_branch
      %28 = sbr.rel (0) target = $region9
    $region8: #{tpu_custom_call.1} parent=1 // pred_region
      %30 = vsyncadd [#allocation6], 0
      %s31 = sshll.u32 %s1, 4
      %s32 = int_to_ptr.hbm [resolvable:$true] %s31
      %s33 = sshll.u32 [#allocation5], 4
      %s34 = int_to_ptr.vmem [resolvable:$true] %s33
      %39 = dma.hbm_to_vmem [thread:$0]  %s32, 256, %s34, [#allocation6], 128, 128, 8
    $region9: #{tpu_custom_call.1} parent=1 // pred_fallthru
      _
    // Predicated region
    $region10: #{tpu_custom_call.1} parent=1 // pred_check
      _
    $region11: #{tpu_custom_call.1} parent=1 // pred_check_branch
      %41 = sbr.rel (0) target = $region13
    $region12: #{tpu_custom_call.1} parent=1 // pred_region
      _
    $region13: #{tpu_custom_call.1} parent=1 // pred_fallthru
      _
    // Predicated region
    $region14: #{tpu_custom_call.1} parent=1 // pred_check
      _
    $region15: #{tpu_custom_call.1} parent=1 // pred_check_branch
      %43 = sbr.rel (0) target = $region17
    $region16: #{tpu_custom_call.1} parent=1 // pred_region
      %45 = vsyncadd [#allocation6], 0
      %s46 = sshll.u32 %s3, 4
      %s47 = int_to_ptr.hbm [resolvable:$true] %s46
      %s48 = sshll.u32 [#allocation7], 4
      %s49 = int_to_ptr.vmem [resolvable:$true] %s48
      %54 = dma.hbm_to_vmem [thread:$0]  %s47, 4096, %s49, [#allocation6], 128, 128, 8
    $region17: #{tpu_custom_call.1} parent=1 // pred_fallthru
      _
    // Predicated region
    $region18: #{tpu_custom_call.1} parent=1 // pred_check
      _
    $region19: #{tpu_custom_call.1} parent=1 // pred_check_branch
      %56 = sbr.rel (0) target = $region21
    $region20: #{tpu_custom_call.1} parent=1 // pred_region
      _
    $region21: #{tpu_custom_call.1} parent=1 // pred_fallthru
      _
    // Predicated region
    $region22: #{tpu_custom_call.1} parent=1 // pred_check
      _
    $region23: #{tpu_custom_call.1} parent=1 // pred_check_branch
      %58 = sbr.rel (0) target = $region25
    $region24: #{tpu_custom_call.1} parent=1 // pred_region
      _
    $region25: #{tpu_custom_call.1} parent=1 // pred_fallthru
      _
    // Predicated region
    $region26: #{tpu_custom_call.1} parent=1 // pred_check
      _
    $region27: #{tpu_custom_call.1} parent=1 // pred_check_branch
      %60 = sbr.rel (0) target = $region29
    $region28: #{tpu_custom_call.1} parent=1 // pred_region
      _
    $region29: #{tpu_custom_call.1} parent=1 // pred_fallthru
      _
    // Predicated region
    $region30: #{tpu_custom_call.1} parent=1 // pred_check
      _
    $region31: #{tpu_custom_call.1} parent=1 // pred_check_branch
      %62 = sbr.rel (0) target = $region33
    $region32: #{tpu_custom_call.1} parent=1 // pred_region
      %64 = dma.done [#allocation4], 64
    $region33: #{tpu_custom_call.1} parent=1 // pred_fallthru
      _
    // Predicated region
    $region34: #{tpu_custom_call.1} parent=1 // pred_check
      _
    $region35: #{tpu_custom_call.1} parent=1 // pred_check_branch
      %66 = sbr.rel (0) target = $region37
    $region36: #{tpu_custom_call.1} parent=1 // pred_region
      %68 = dma.done [#allocation6], 256
    $region37: #{tpu_custom_call.1} parent=1 // pred_fallthru
      _
    // Predicated region
    $region38: #{tpu_custom_call.1} parent=1 // pred_check
      _
    $region39: #{tpu_custom_call.1} parent=1 // pred_check_branch
      %70 = sbr.rel (0) target = $region41
    $region40: #{tpu_custom_call.1} parent=1 // pred_region
      %72 = dma.done [#allocation6], 4096
    $region41: #{tpu_custom_call.1} parent=1 // pred_fallthru
      _
    %v74 = vld [vmem:[#allocation3] sm:$0xf]
    %v75 = vld [vmem:[#allocation5] sm:$0xff]
    %v76 = vld [vmem:[#allocation5 + $0x8] sm:$0xff]
    %v77 = vld [vmem:[%s2] sm:$0x3]
    %v79 = vperm.slane %v77, 0
    %v80 = vperm.slane %v77, 1
    %v85 = vunpack.c.l.b16 %v75
    %v86 = vunpack.c.h.b16 %v75
    %v87 = vunpack.c.l.b16 %v76
    %v88 = vunpack.c.h.b16 %v76
    %v89 = vpack.c.b16 %v87, %v85
    %v90 = vpack.c.b16 %v88, %v86
    %vm93 = vcmask 130048
    %v95 = vsel %vm93, %v74, 0
    %97 = vmatpush.bf16.msra.mxu0 0
    %98 = vmatpush.bf16.msra.mxu0 0
    %99 = vmatpush.bf16.msra.mxu0 0
    %100 = vmatpush.bf16.msra.mxu0 0
    %101 = vmatpush.bf16.msra.mxu0 0
    %102 = vmatpush.bf16.msra.mxu0 0
    %103 = vmatpush.bf16.msra.mxu0 0
    %104 = vmatpush.bf16.msra.mxu0 %v89
    %105 = vmatmul.bf16.gmra.mxu0 %v95
    %v106 = vpop.f32.mrf.mxu0
    %v107 = vadd.f32 %v79, %v106
    %v108 = vpop.f32.mrf.mxu0
    %109 = vdwg.mxu0
    %110 = vmatpush.bf16.msra.mxu0 0
    %111 = vmatpush.bf16.msra.mxu0 0
    %112 = vmatpush.bf16.msra.mxu0 0
    %113 = vmatpush.bf16.msra.mxu0 0
    %114 = vmatpush.bf16.msra.mxu0 0
    %115 = vmatpush.bf16.msra.mxu0 0
    %116 = vmatpush.bf16.msra.mxu0 0
    %117 = vmatpush.bf16.msra.mxu0 %v90
    %118 = vmatmul.bf16.gmra.mxu0 %v95
    %v119 = vpop.f32.mrf.mxu0
    %v120 = vadd.f32 %v80, %v119
    %v121 = vpop.f32.mrf.mxu0
    %122 = vdwg.mxu0
    %v123 = vmax.f32 %v107, 0.0
    %v124 = vmax.f32 %v120, 0.0
    %v125 = vpack.c.bf16 %v123, %v123
    %v126 = vpack.c.bf16 %v124, %v124
    %v127 = vld [vmem:[#allocation7] sm:$0xff]
    %v128 = vld [vmem:[#allocation7 + $0x8] sm:$0xff]
    %v129 = vld [vmem:[#allocation7 + $0x10] sm:$0xff]
    %v130 = vld [vmem:[#allocation7 + $0x18] sm:$0xff]
    %v131 = vld [vmem:[#allocation7 + $0x20] sm:$0xff]
    %v132 = vld [vmem:[#allocation7 + $0x28] sm:$0xff]
    %v133 = vld [vmem:[#allocation7 + $0x30] sm:$0xff]
    %v134 = vld [vmem:[#allocation7 + $0x38] sm:$0xff]
    %v135 = vld [vmem:[#allocation7 + $0x40] sm:$0xff]
    %v136 = vld [vmem:[#allocation7 + $0x48] sm:$0xff]
    %v137 = vld [vmem:[#allocation7 + $0x50] sm:$0xff]
    %v138 = vld [vmem:[#allocation7 + $0x58] sm:$0xff]
    %v139 = vld [vmem:[#allocation7 + $0x60] sm:$0xff]
    %v140 = vld [vmem:[#allocation7 + $0x68] sm:$0xff]
    %v141 = vld [vmem:[#allocation7 + $0x70] sm:$0xff]
    %v142 = vld [vmem:[#allocation7 + $0x78] sm:$0xff]
    %v143 = vld [vmem:[#allocation7 + $0x80] sm:$0xff]
    %v144 = vld [vmem:[#allocation7 + $0x88] sm:$0xff]
    %v145 = vld [vmem:[#allocation7 + $0x90] sm:$0xff]
    %v146 = vld [vmem:[#allocation7 + $0x98] sm:$0xff]
    %v147 = vld [vmem:[#allocation7 + $0xa0] sm:$0xff]
    %v148 = vld [vmem:[#allocation7 + $0xa8] sm:$0xff]
    %v149 = vld [vmem:[#allocation7 + $0xb0] sm:$0xff]
    %v150 = vld [vmem:[#allocation7 + $0xb8] sm:$0xff]
    %v151 = vld [vmem:[#allocation7 + $0xc0] sm:$0xff]
    %v152 = vld [vmem:[#allocation7 + $0xc8] sm:$0xff]
    %v153 = vld [vmem:[#allocation7 + $0xd0] sm:$0xff]
    %v154 = vld [vmem:[#allocation7 + $0xd8] sm:$0xff]
    %v155 = vld [vmem:[#allocation7 + $0xe0] sm:$0xff]
    %v156 = vld [vmem:[#allocation7 + $0xe8] sm:$0xff]
    %v157 = vld [vmem:[#allocation7 + $0xf0] sm:$0xff]
    %v158 = vld [vmem:[#allocation7 + $0xf8] sm:$0xff]
    %v159 = vld [vmem:[%s4] sm:$0x3]
    %v161 = vperm.slane %v159, 0
    %v162 = vperm.slane %v159, 1
    %v197 = vunpack.c.l.b16 %v127
    %v198 = vunpack.c.h.b16 %v127
    %v199 = vunpack.c.l.b16 %v128
    %v200 = vunpack.c.h.b16 %v128
    %v201 = vunpack.c.l.b16 %v129
    %v202 = vunpack.c.h.b16 %v129
    %v203 = vunpack.c.l.b16 %v130
    %v204 = vunpack.c.h.b16 %v130
    %v205 = vunpack.c.l.b16 %v131
    %v206 = vunpack.c.h.b16 %v131
    %v207 = vunpack.c.l.b16 %v132
    %v208 = vunpack.c.h.b16 %v132
    %v209 = vunpack.c.l.b16 %v133
    %v210 = vunpack.c.h.b16 %v133
    %v211 = vunpack.c.l.b16 %v134
    %v212 = vunpack.c.h.b16 %v134
    %v213 = vunpack.c.l.b16 %v135
    %v214 = vunpack.c.h.b16 %v135
    %v215 = vunpack.c.l.b16 %v136
    %v216 = vunpack.c.h.b16 %v136
    %v217 = vunpack.c.l.b16 %v137
    %v218 = vunpack.c.h.b16 %v137
    %v219 = vunpack.c.l.b16 %v138
    %v220 = vunpack.c.h.b16 %v138
    %v221 = vunpack.c.l.b16 %v139
    %v222 = vunpack.c.h.b16 %v139
    %v223 = vunpack.c.l.b16 %v140
    %v224 = vunpack.c.h.b16 %v140
    %v225 = vunpack.c.l.b16 %v141
    %v226 = vunpack.c.h.b16 %v141
    %v227 = vunpack.c.l.b16 %v142
    %v228 = vunpack.c.h.b16 %v142
    %v229 = vunpack.c.l.b16 %v143
    %v230 = vunpack.c.h.b16 %v143
    %v231 = vunpack.c.l.b16 %v144
    %v232 = vunpack.c.h.b16 %v144
    %v233 = vunpack.c.l.b16 %v145
    %v234 = vunpack.c.h.b16 %v145
    %v235 = vunpack.c.l.b16 %v146
    %v236 = vunpack.c.h.b16 %v146
    %v237 = vunpack.c.l.b16 %v147
    %v238 = vunpack.c.h.b16 %v147
    %v239 = vunpack.c.l.b16 %v148
    %v240 = vunpack.c.h.b16 %v148
    %v241 = vunpack.c.l.b16 %v149
    %v242 = vunpack.c.h.b16 %v149
    %v243 = vunpack.c.l.b16 %v150
    %v244 = vunpack.c.h.b16 %v150
    %v245 = vunpack.c.l.b16 %v151
    %v246 = vunpack.c.h.b16 %v151
    %v247 = vunpack.c.l.b16 %v152
    %v248 = vunpack.c.h.b16 %v152
    %v249 = vunpack.c.l.b16 %v153
    %v250 = vunpack.c.h.b16 %v153
    %v251 = vunpack.c.l.b16 %v154
    %v252 = vunpack.c.h.b16 %v154
    %v253 = vunpack.c.l.b16 %v155
    %v254 = vunpack.c.h.b16 %v155
    %v255 = vunpack.c.l.b16 %v156
    %v256 = vunpack.c.h.b16 %v156
    %v257 = vunpack.c.l.b16 %v157
    %v258 = vunpack.c.h.b16 %v157
    %v259 = vunpack.c.l.b16 %v158
    %v260 = vunpack.c.h.b16 %v158
    %v261 = vpack.c.b16 %v199, %v197
    %v262 = vpack.c.b16 %v200, %v198
    %v263 = vpack.c.b16 %v203, %v201
    %v264 = vpack.c.b16 %v204, %v202
    %v265 = vpack.c.b16 %v207, %v205
    %v266 = vpack.c.b16 %v208, %v206
    %v267 = vpack.c.b16 %v211, %v209
    %v268 = vpack.c.b16 %v212, %v210
    %v269 = vpack.c.b16 %v215, %v213
    %v270 = vpack.c.b16 %v216, %v214
    %v271 = vpack.c.b16 %v219, %v217
    %v272 = vpack.c.b16 %v220, %v218
    %v273 = vpack.c.b16 %v223, %v221
    %v274 = vpack.c.b16 %v224, %v222
    %v275 = vpack.c.b16 %v227, %v225
    %v276 = vpack.c.b16 %v228, %v226
    %v277 = vpack.c.b16 %v231, %v229
    %v278 = vpack.c.b16 %v232, %v230
    %v279 = vpack.c.b16 %v235, %v233
    %v280 = vpack.c.b16 %v236, %v234
    %v281 = vpack.c.b16 %v239, %v237
    %v282 = vpack.c.b16 %v240, %v238
    %v283 = vpack.c.b16 %v243, %v241
    %v284 = vpack.c.b16 %v244, %v242
    %v285 = vpack.c.b16 %v247, %v245
    %v286 = vpack.c.b16 %v248, %v246
    %v287 = vpack.c.b16 %v251, %v249
    %v288 = vpack.c.b16 %v252, %v250
    %v289 = vpack.c.b16 %v255, %v253
    %v290 = vpack.c.b16 %v256, %v254
    %v291 = vpack.c.b16 %v259, %v257
    %v292 = vpack.c.b16 %v260, %v258
    %325 = vmatpush.bf16.msra.mxu0 %v275
    %326 = vmatpush.bf16.msra.mxu0 %v273
    %327 = vmatpush.bf16.msra.mxu0 %v271
    %328 = vmatpush.bf16.msra.mxu0 %v269
    %329 = vmatpush.bf16.msra.mxu0 %v267
    %330 = vmatpush.bf16.msra.mxu0 %v265
    %331 = vmatpush.bf16.msra.mxu0 %v263
    %332 = vmatpush.bf16.msra.mxu0 %v261
    %333 = vmatmul.bf16.gmra.mxu0 %v125
    %v334 = vpop.f32.mrf.mxu0
    %v335 = vadd.f32 %v161, %v334
    %v336 = vpop.f32.mrf.mxu0
    %337 = vdwg.mxu0
    %338 = vmatpush.bf16.msra.mxu0 %v291
    %339 = vmatpush.bf16.msra.mxu0 %v289
    %340 = vmatpush.bf16.msra.mxu0 %v287
    %341 = vmatpush.bf16.msra.mxu0 %v285
    %342 = vmatpush.bf16.msra.mxu0 %v283
    %343 = vmatpush.bf16.msra.mxu0 %v281
    %344 = vmatpush.bf16.msra.mxu0 %v279
    %345 = vmatpush.bf16.msra.mxu0 %v277
    %346 = vmatmul.bf16.gmra.mxu0 %v126
    %v347 = vpop.f32.mrf.mxu0
    %v348 = vadd.f32 %v335, %v347
    %v349 = vpop.f32.mrf.mxu0
    %350 = vdwg.mxu0
    %351 = vmatpush.bf16.msra.mxu0 %v276
    %352 = vmatpush.bf16.msra.mxu0 %v274
    %353 = vmatpush.bf16.msra.mxu0 %v272
    %354 = vmatpush.bf16.msra.mxu0 %v270
    %355 = vmatpush.bf16.msra.mxu0 %v268
    %356 = vmatpush.bf16.msra.mxu0 %v266
    %357 = vmatpush.bf16.msra.mxu0 %v264
    %358 = vmatpush.bf16.msra.mxu0 %v262
    %359 = vmatmul.bf16.gmra.mxu0 %v125
    %v360 = vpop.f32.mrf.mxu0
    %v361 = vadd.f32 %v162, %v360
    %v362 = vpop.f32.mrf.mxu0
    %363 = vdwg.mxu0
    %364 = vmatpush.bf16.msra.mxu0 %v292
    %365 = vmatpush.bf16.msra.mxu0 %v290
    %366 = vmatpush.bf16.msra.mxu0 %v288
    %367 = vmatpush.bf16.msra.mxu0 %v286
    %368 = vmatpush.bf16.msra.mxu0 %v284
    %369 = vmatpush.bf16.msra.mxu0 %v282
    %370 = vmatpush.bf16.msra.mxu0 %v280
    %371 = vmatpush.bf16.msra.mxu0 %v278
    %372 = vmatmul.bf16.gmra.mxu0 %v126
    %v373 = vpop.f32.mrf.mxu0
    %v374 = vadd.f32 %v361, %v373
    %v375 = vpop.f32.mrf.mxu0
    %376 = vdwg.mxu0
    %v377 = vmax.f32 %v348, 0.0
    %v378 = vmax.f32 %v374, 0.0
    %v379 = vld [vmem:[%s5] sm:$0x3]
    %v381 = vperm.slane %v379, 0
    %v382 = vperm.slane %v379, 1
    %v385 = vmul.f32 %v377, %v381
    %v386 = vmul.f32 %v378, %v382
    %v387 = vadd.f32 %v385, %v386
    %388 = vadd.xlane.f32.xlu0 %v387
    %v389 = vpop.xlane.xlu0 %388
    %v390 = vld [vmem:[#allocation2] sm:$0x1]
    %v392 = vperm.slane %v390, 0
    %v394 = vadd.f32 %v389, %v392
    %vm395 = vcmask 7168
    %396 = vst.msk [vmem:[%s7] sm:$0xff] %vm395, %v394
    // Predicated region
    $region42: #{tpu_custom_call.1} parent=1 // pred_check
      _
    $region43: #{tpu_custom_call.1} parent=1 // pred_check_branch
      %398 = sbr.rel (0) target = $region45
    $region44: #{tpu_custom_call.1} parent=1 // pred_region
      _
    $region45: #{tpu_custom_call.1} parent=1 // pred_fallthru
      _
    // Predicated region
    $region46: #{tpu_custom_call.1} parent=1 // pred_check
      _
    $region47: #{tpu_custom_call.1} parent=1 // pred_check_branch
      %400 = sbr.rel (0) target = $region49
    $region48: #{tpu_custom_call.1} parent=1 // pred_region
      _
    $region49: #{tpu_custom_call.1} parent=1 // pred_fallthru
      _
    %401 = vsyncpa [#allocation4], 1
    %402 = vsyncpa [#allocation6], 1

</llo_original>
